<compile_context>
chip_gen: v7x
topology: tpu7x:2x2x1
jax: 0.10.0
libtpu: 0.0.40
codegen_flags: <defaults>
</compile_context>

<pallas_src>
import functools

import jax
import jax.numpy as jnp
from jax.experimental import pallas as pl
from jax.experimental.pallas import tpu as pltpu

_SUBLANE = 8          # f32 sublane width (second-to-last dim granularity)
_MAX_TILE_B = 512     # large-batch row tile (sweep 512..1024 on real workloads)


def _ceil_to(n, m):
    return ((n + m - 1) // m) * m


def _actor_fused_kernel(*refs, n_layers, max_action):
    """refs = (x_ref, w0, b0, w1, b1, ..., w_{L-1}, b_{L-1}, o_ref).

    The whole MLP runs back-to-back for one batch tile; hidden activations
    stay as traced values (vregs) -- no VMEM scratch, no HBM round-trips.
    """
    x_ref = refs[0]
    o_ref = refs[-1]
    wb = refs[1:-1]

    h = x_ref[...]
    for i in range(n_layers):
        w = wb[2 * i][...]
        b = wb[2 * i + 1][...]
        y = jnp.dot(h, w, preferred_element_type=jnp.float32) + b
        if i < n_layers - 1:
            h = jnp.maximum(y, 0.0)          # ReLU hidden layers (VPU)
        else:
            h = max_action * jnp.tanh(y)     # final layer (EUP tanh)
    o_ref[...] = h.astype(o_ref.dtype)


def actor_forward(params, x, max_action):
    """Fused Pallas forward pass of the TD3 Actor.

    params: list of (w, b) with w shaped (in, out), b shaped (1, out) -- used
            as-is, no padding, no per-call re-materialization.
    x: (batch, state_dim) float32.
    """
    B, din = x.shape
    n_layers = len(params)
    dims = [din] + [w.shape[1] for (w, _) in params]
    dout = dims[-1]

    # ---- Batch tiling --------------------------------------------------
    # * B <= 8: one 8-row tile (nothing to split).
    # * otherwise: at least 2 grid steps (keeps both v7x TensorCores busy),
    #   capped at _MAX_TILE_B rows so per-step overhead is amortized for
    #   large batches while VMEM stays tiny.
    if B <= _SUBLANE:
        tile_b = _SUBLANE
    else:
        tile_b = min(_MAX_TILE_B, _ceil_to(pl.cdiv(B, 2), _SUBLANE))
    b_pad = _ceil_to(B, tile_b)

    # Only the batch axis is ever padded; feature axes are natural width.
    x_in = x if b_pad == B else jnp.zeros((b_pad, din), x.dtype).at[:B].set(x)

    kernel = functools.partial(
        _actor_fused_kernel, n_layers=n_layers, max_action=float(max_action)
    )

    # x / output march over batch tiles; weights & biases pin to block (0, 0)
    # so they are DMA'd once and stay VMEM-resident for the whole grid.
    in_specs = [pl.BlockSpec((tile_b, din), lambda i: (i, 0))]
    flat_params = []
    for li in range(n_layers):
        w, b = params[li]
        in_specs.append(pl.BlockSpec(w.shape, lambda i: (0, 0)))   # full-array block
        in_specs.append(pl.BlockSpec(b.shape, lambda i: (0, 0)))   # full-array block
        flat_params += [w, b]

    # Advisory cost so XLA doesn't over-serialize surrounding ops.
    flops = 2 * b_pad * sum(dims[i] * dims[i + 1] for i in range(n_layers))
    bytes_accessed = 4 * (
        b_pad * din + b_pad * dout + sum(w.size + b.size for (w, b) in params)
    )
    cost = pl.CostEstimate(
        flops=flops, transcendentals=b_pad * dout, bytes_accessed=bytes_accessed
    )

    out = pl.pallas_call(
        kernel,
        out_shape=jax.ShapeDtypeStruct((b_pad, dout), jnp.float32),
        grid=(b_pad // tile_b,),
        in_specs=in_specs,
        # Natural (unpadded) output width: output bytes are tiny, so the
        # bandwidth saving beats the masked-store penalty.
        out_specs=pl.BlockSpec((tile_b, dout), lambda i: (i, 0)),
        compiler_params=pltpu.CompilerParams(
            dimension_semantics=("parallel",)
        ),
        cost_estimate=cost,
    )(x_in, *flat_params)

    # Padded batch rows (if any) hold tanh(bias) garbage; never returned.
    return out if b_pad == B else out[:B]


def init_actor_params(key, dims):
    """Deterministic init matching nn.Linear's U(-1/sqrt(fan_in), 1/sqrt(fan_in)).

    Weights are stored already transposed to (in, out) and at natural width
    (no padding), so the wrapper does zero per-call parameter work.
    """
    params = []
    for i in range(len(dims) - 1):
        fan_in, fan_out = dims[i], dims[i + 1]
        key, kw, kb = jax.random.split(key, 3)
        bound = 1.0 / jnp.sqrt(fan_in)
        w = jax.random.uniform(kw, (fan_in, fan_out), jnp.float32, -bound, bound)
        b = jax.random.uniform(kb, (1, fan_out), jnp.float32, -bound, bound)
        params.append((w, b))
    return params


def actor_forward_ref(params, x, max_action):
    """Pure-JAX reference for correctness check."""
    h = x
    for i in range(len(params) - 1):
        w, b = params[i]
        h = jnp.maximum(h @ w + b, 0.0)
    w, b = params[-1]
    return max_action * jnp.tanh(h @ w + b)


if __name__ == "__main__":
    dims = [16, 64, 64, 8]        # state_dim -> hidden -> hidden -> action_dim
    max_action = 2.0

    key = jax.random.PRNGKey(0)
    params = init_actor_params(key, dims)

    # Small batch: single 8-row tile, grid=(1,).
    key, kx = jax.random.split(key)
    x_small = jax.random.normal(kx, (4, dims[0]), jnp.float32)
    out_small = jax.block_until_ready(actor_forward(params, x_small, max_action))
    ref_small = actor_forward_ref(params, x_small, max_action)
    assert out_small.shape == (4, dims[-1])
    assert jnp.allclose(out_small, ref_small, atol=2e-5, rtol=2e-5), "mismatch (small)"

    # Medium batch: exercises batch padding and a multi-step parallel grid.
    key, kx2 = jax.random.split(key)
    x_med = jax.random.normal(kx2, (20, dims[0]), jnp.float32)
    out_med = jax.block_until_ready(actor_forward(params, x_med, max_action))
    ref_med = actor_forward_ref(params, x_med, max_action)
    assert out_med.shape == (20, dims[-1])
    assert jnp.allclose(out_med, ref_med, atol=2e-5, rtol=2e-5), "mismatch (medium)"

    print("KERNEL_OK")
</pallas_src>

<mosaic_0001>
module attributes {stable_mosaic.version = 11 : i64} {
  func.func @_actor_fused_kernel(%arg0: i32, %arg1: memref<8x16xf32, #tpu.memory_space<vmem>>, %arg2: memref<16x64xf32, #tpu.memory_space<vmem>>, %arg3: memref<1x64xf32, #tpu.memory_space<vmem>>, %arg4: memref<64x64xf32, #tpu.memory_space<vmem>>, %arg5: memref<1x64xf32, #tpu.memory_space<vmem>>, %arg6: memref<64x8xf32, #tpu.memory_space<vmem>>, %arg7: memref<1x8xf32, #tpu.memory_space<vmem>>, %arg8: memref<8x8xf32, #tpu.memory_space<vmem>>) attributes {dimension_semantics = [#tpu.dimension_semantics<parallel>], iteration_bounds = array<i64: 1>, scalar_prefetch = 0 : i64, scratch_operands = 0 : i64, tpu.core_type = #tpu.core_type<tc>, window_params = [{transform_indices = @transform_0, window_bounds = array<i64: 8, 16>}, {pipeline_mode = #tpu.pipeline_mode<synchronous>, transform_indices = @transform_1, window_bounds = array<i64: 16, 64>}, {pipeline_mode = #tpu.pipeline_mode<synchronous>, transform_indices = @transform_2, window_bounds = array<i64: 1, 64>}, {pipeline_mode = #tpu.pipeline_mode<synchronous>, transform_indices = @transform_3, window_bounds = array<i64: 64, 64>}, {pipeline_mode = #tpu.pipeline_mode<synchronous>, transform_indices = @transform_4, window_bounds = array<i64: 1, 64>}, {pipeline_mode = #tpu.pipeline_mode<synchronous>, transform_indices = @transform_5, window_bounds = array<i64: 64, 8>}, {pipeline_mode = #tpu.pipeline_mode<synchronous>, transform_indices = @transform_6, window_bounds = array<i64: 1, 8>}, {transform_indices = @transform_7, window_bounds = array<i64: 8, 8>}]} {
    %c0 = arith.constant 0 : index
    %c0_0 = arith.constant 0 : index
    %0 = vector.load %arg1[%c0, %c0_0] : memref<8x16xf32, #tpu.memory_space<vmem>>, vector<8x16xf32>
    %c0_1 = arith.constant 0 : index
    %c0_2 = arith.constant 0 : index
    %1 = vector.load %arg2[%c0_1, %c0_2] : memref<16x64xf32, #tpu.memory_space<vmem>>, vector<16x64xf32>
    %c0_3 = arith.constant 0 : index
    %c0_4 = arith.constant 0 : index
    %2 = vector.load %arg3[%c0_3, %c0_4] : memref<1x64xf32, #tpu.memory_space<vmem>>, vector<1x64xf32>
    %cst = arith.constant dense<0.000000e+00> : vector<8x64xf32>
    %3 = tpu.matmul %0, %1, %cst {dimension_numbers = #tpu.dot_dimension_numbers<[1], [0], [0], [1], [0, 0, 1, 1], [], []>} : vector<8x16xf32>, vector<16x64xf32>, vector<8x64xf32> -> vector<8x64xf32>
    %4 = vector.broadcast %2 : vector<1x64xf32> to vector<8x64xf32>
    %5 = arith.addf %3, %4 : vector<8x64xf32>
    %cst_5 = arith.constant 0.000000e+00 : f32
    %6 = vector.broadcast %cst_5 : f32 to vector<8x64xf32>
    %7 = arith.maximumf %5, %6 : vector<8x64xf32>
    %c0_6 = arith.constant 0 : index
    %c0_7 = arith.constant 0 : index
    %8 = vector.load %arg4[%c0_6, %c0_7] : memref<64x64xf32, #tpu.memory_space<vmem>>, vector<64x64xf32>
    %c0_8 = arith.constant 0 : index
    %c0_9 = arith.constant 0 : index
    %9 = vector.load %arg5[%c0_8, %c0_9] : memref<1x64xf32, #tpu.memory_space<vmem>>, vector<1x64xf32>
    %cst_10 = arith.constant dense<0.000000e+00> : vector<8x64xf32>
    %10 = tpu.matmul %7, %8, %cst_10 {dimension_numbers = #tpu.dot_dimension_numbers<[1], [0], [0], [1], [0, 0, 1, 1], [], []>} : vector<8x64xf32>, vector<64x64xf32>, vector<8x64xf32> -> vector<8x64xf32>
    %11 = vector.broadcast %9 : vector<1x64xf32> to vector<8x64xf32>
    %12 = arith.addf %10, %11 : vector<8x64xf32>
    %cst_11 = arith.constant 0.000000e+00 : f32
    %13 = vector.broadcast %cst_11 : f32 to vector<8x64xf32>
    %14 = arith.maximumf %12, %13 : vector<8x64xf32>
    %c0_12 = arith.constant 0 : index
    %c0_13 = arith.constant 0 : index
    %15 = vector.load %arg6[%c0_12, %c0_13] : memref<64x8xf32, #tpu.memory_space<vmem>>, vector<64x8xf32>
    %c0_14 = arith.constant 0 : index
    %c0_15 = arith.constant 0 : index
    %16 = vector.load %arg7[%c0_14, %c0_15] : memref<1x8xf32, #tpu.memory_space<vmem>>, vector<1x8xf32>
    %cst_16 = arith.constant dense<0.000000e+00> : vector<8x8xf32>
    %17 = tpu.matmul %14, %15, %cst_16 {dimension_numbers = #tpu.dot_dimension_numbers<[1], [0], [0], [1], [0, 0, 1, 1], [], []>} : vector<8x64xf32>, vector<64x8xf32>, vector<8x8xf32> -> vector<8x8xf32>
    %18 = vector.broadcast %16 : vector<1x8xf32> to vector<8x8xf32>
    %19 = arith.addf %17, %18 : vector<8x8xf32>
    %20 = math.tanh %19 : vector<8x8xf32>
    %cst_17 = arith.constant 2.000000e+00 : f32
    %21 = vector.broadcast %cst_17 : f32 to vector<8x8xf32>
    %22 = arith.mulf %21, %20 : vector<8x8xf32>
    %c0_18 = arith.constant 0 : index
    %c0_19 = arith.constant 0 : index
    %23 = vector.load %arg8[%c0_18, %c0_19] : memref<8x8xf32, #tpu.memory_space<vmem>>, vector<8x8xf32>
    tpu.vector_store %arg8[%c0_18, %c0_19], %22 {strides = array<i32>} : memref<8x8xf32, #tpu.memory_space<vmem>>, vector<8x8xf32>,
    return
  }
  func.func @transform_0(%arg0: i32) -> (i32, i32) {
    %c0_i32 = arith.constant 0 : i32
    %c0_i32_0 = arith.constant 0 : i32
    return %arg0, %c0_i32 : i32, i32
  }
  func.func @transform_1(%arg0: i32) -> (i32, i32) {
    %c0_i32 = arith.constant 0 : i32
    %c0_i32_0 = arith.constant 0 : i32
    %c0_i32_1 = arith.constant 0 : i32
    return %c0_i32, %c0_i32_0 : i32, i32
  }
  func.func @transform_2(%arg0: i32) -> (i32, i32) {
    %c0_i32 = arith.constant 0 : i32
    %c0_i32_0 = arith.constant 0 : i32
    %c0_i32_1 = arith.constant 0 : i32
    return %c0_i32, %c0_i32_0 : i32, i32
  }
  func.func @transform_3(%arg0: i32) -> (i32, i32) {
    %c0_i32 = arith.constant 0 : i32
    %c0_i32_0 = arith.constant 0 : i32
    %c0_i32_1 = arith.constant 0 : i32
    return %c0_i32, %c0_i32_0 : i32, i32
  }
  func.func @transform_4(%arg0: i32) -> (i32, i32) {
    %c0_i32 = arith.constant 0 : i32
    %c0_i32_0 = arith.constant 0 : i32
    %c0_i32_1 = arith.constant 0 : i32
    return %c0_i32, %c0_i32_0 : i32, i32
  }
  func.func @transform_5(%arg0: i32) -> (i32, i32) {
    %c0_i32 = arith.constant 0 : i32
    %c0_i32_0 = arith.constant 0 : i32
    %c0_i32_1 = arith.constant 0 : i32
    return %c0_i32, %c0_i32_0 : i32, i32
  }
  func.func @transform_6(%arg0: i32) -> (i32, i32) {
    %c0_i32 = arith.constant 0 : i32
    %c0_i32_0 = arith.constant 0 : i32
    %c0_i32_1 = arith.constant 0 : i32
    return %c0_i32, %c0_i32_0 : i32, i32
  }
  func.func @transform_7(%arg0: i32) -> (i32, i32) {
    %c0_i32 = arith.constant 0 : i32
    %c0_i32_0 = arith.constant 0 : i32
    return %arg0, %c0_i32 : i32, i32
  }
}

</mosaic_0001>

<llo_original>
// kernel: tpu_custom_call.1
$region0: #{tpu_custom_call.1}
  #allocation0 [shape = 'u32[]', space=smem, size = 0x4, offset = 0x4, fixed_abs, tag = 'smem constant byte address 0x4 - core index']
  #allocation1 [shape = 'u32[144,128]{1,0:T(1,128)}', space=vmem, size = 0x12000, scoped, tag = 'internal scratch']
  %s0 = inlined_call_operand.hbm [shape: f32[8,16], index: 0, kind: input, shape index: {}]
  %s1 = inlined_call_operand.vmem [shape: f32[16,64], index: 1, kind: input, shape index: {}]
  %s2 = inlined_call_operand.vmem [shape: f32[1,64], index: 2, kind: input, shape index: {}]
  %s3 = inlined_call_operand.vmem [shape: f32[64,64], index: 3, kind: input, shape index: {}]
  %s4 = inlined_call_operand.vmem [shape: f32[1,64], index: 4, kind: input, shape index: {}]
  %s5 = inlined_call_operand.vmem [shape: f32[64,8], index: 5, kind: input, shape index: {}]
  %s6 = inlined_call_operand.vmem [shape: f32[1,8], index: 6, kind: input, shape index: {}]
  %s7 = inlined_call_operand.hbm [shape: f32[8,8], index: 7, kind: output, shape index: {}]
  %s8 = sld [smem:[#allocation0]]
  $region42: #{tpu_custom_call.1} parent=0
    _
  %s10 = ssub.s32 1, %s8
  %s11 = scalar_select 0, %s10, %s8
  $region1: #{tpu_custom_call.1} parent=0
    #allocation2 [shape = 'u8[4096]{0}', space=vmem, size = 0x1000, scoped, tag = 'input window, operand 0, single buffered']
    #allocation3 [shape = 's32[1]{0}', space=sflag, size = 0x4, scoped, tag = 'scoped memory for tpu_custom_call.1']
    #allocation4 [shape = 's32[1]{0}', space=sflag, size = 0x4, scoped, tag = 'scoped memory for tpu_custom_call.1']
    #allocation5 [shape = 'u8[4096]{0}', space=vmem, size = 0x1000, scoped, tag = 'output window, operand 0, single buffered']
    %12 = vsyncpa [#allocation3], 0
    %13 = vsyncpa [#allocation4], 0
    // Predicated region
    $region2: #{tpu_custom_call.1} parent=1 // pred_check
      _
    $region3: #{tpu_custom_call.1} parent=1 // pred_check_branch
      %15 = sbr.rel (0) target = $region5
    $region4: #{tpu_custom_call.1} parent=1 // pred_region
      %s17 = ssub.s32 128, 128
      %18 = vsyncadd [#allocation3], %s17
      %s20 = sshll.u32 [#allocation2], 4
      %s21 = int_to_ptr.vmem [resolvable:$true] %s20
      %23 = dma.hbm_to_vmem [thread:$0]  %s0, 128, %s21, [#allocation3]
    $region5: #{tpu_custom_call.1} parent=1 // pred_fallthru
      _
    // Predicated region
    $region6: #{tpu_custom_call.1} parent=1 // pred_check
      _
    $region7: #{tpu_custom_call.1} parent=1 // pred_check_branch
      %25 = sbr.rel (0) target = $region9
    $region8: #{tpu_custom_call.1} parent=1 // pred_region
      _
    $region9: #{tpu_custom_call.1} parent=1 // pred_fallthru
      _
    // Predicated region
    $region10: #{tpu_custom_call.1} parent=1 // pred_check
      _
    $region11: #{tpu_custom_call.1} parent=1 // pred_check_branch
      %27 = sbr.rel (0) target = $region13
    $region12: #{tpu_custom_call.1} parent=1 // pred_region
      _
    $region13: #{tpu_custom_call.1} parent=1 // pred_fallthru
      _
    // Predicated region
    $region14: #{tpu_custom_call.1} parent=1 // pred_check
      _
    $region15: #{tpu_custom_call.1} parent=1 // pred_check_branch
      %29 = sbr.rel (0) target = $region17
    $region16: #{tpu_custom_call.1} parent=1 // pred_region
      _
    $region17: #{tpu_custom_call.1} parent=1 // pred_fallthru
      _
    // Predicated region
    $region18: #{tpu_custom_call.1} parent=1 // pred_check
      _
    $region19: #{tpu_custom_call.1} parent=1 // pred_check_branch
      %31 = sbr.rel (0) target = $region21
    $region20: #{tpu_custom_call.1} parent=1 // pred_region
      _
    $region21: #{tpu_custom_call.1} parent=1 // pred_fallthru
      _
    // Predicated region
    $region22: #{tpu_custom_call.1} parent=1 // pred_check
      _
    $region23: #{tpu_custom_call.1} parent=1 // pred_check_branch
      %33 = sbr.rel (0) target = $region25
    $region24: #{tpu_custom_call.1} parent=1 // pred_region
      _
    $region25: #{tpu_custom_call.1} parent=1 // pred_fallthru
      _
    // Predicated region
    $region26: #{tpu_custom_call.1} parent=1 // pred_check
      _
    $region27: #{tpu_custom_call.1} parent=1 // pred_check_branch
      %35 = sbr.rel (0) target = $region29
    $region28: #{tpu_custom_call.1} parent=1 // pred_region
      _
    $region29: #{tpu_custom_call.1} parent=1 // pred_fallthru
      _
    // Predicated region
    $region30: #{tpu_custom_call.1} parent=1 // pred_check
      _
    $region31: #{tpu_custom_call.1} parent=1 // pred_check_branch
      %37 = sbr.rel (0) target = $region33
    $region32: #{tpu_custom_call.1} parent=1 // pred_region
      %38 = dma.done [#allocation3], 128
    $region33: #{tpu_custom_call.1} parent=1 // pred_fallthru
      _
    %v39 = vld [vmem:[#allocation2] sm:$0xff]
    %v40 = vld [vmem:[%s1] sm:$0xff]
    %v41 = vld [vmem:[%s1 + $0x8] sm:$0xff]
    %v42 = vld [vmem:[%s2] sm:$0x1]
    %v44 = vlaneseq
    %v45 = vshrl.u32 %v44, 7
    %v46 = vsub.s32 0, %v45
    %v47 = vrot.slane %v42, %v46
    %vm49 = vcmask 130048
    %v51 = vsel %vm49, %v39, 0
    %53 = vmatprep.subr.mxu0 0.0
    %54 = vmatpush1.msra.mxu0 %v40
    %55 = vmatprep.subr.mxu0 0.0
    %56 = vmatpush1.msra.mxu0 %v41
    %57 = vmatprep.subr.mxu0 0.0
    %58 = vmatpush1.msra.mxu0 0.0
    %59 = vmatprep.subr.mxu0 0.0
    %60 = vmatpush1.msra.mxu0 0.0
    %61 = vmatprep.subr.mxu0 0.0
    %62 = vmatpush1.msra.mxu0 0.0
    %63 = vmatprep.subr.mxu0 0.0
    %64 = vmatpush1.msra.mxu0 0.0
    %65 = vmatprep.subr.mxu0 0.0
    %66 = vmatpush1.msra.mxu0 0.0
    %67 = vmatprep.subr.mxu0 0.0
    %68 = vmatpush1.msra.mxu0 0.0
    %69 = vmatprep.subr.mxu0 0.0
    %70 = vmatpush1.msra.mxu0 0.0
    %71 = vmatprep.subr.mxu0 0.0
    %72 = vmatpush1.msra.mxu0 0.0
    %73 = vmatprep.subr.mxu0 0.0
    %74 = vmatpush1.msra.mxu0 0.0
    %75 = vmatprep.subr.mxu0 0.0
    %76 = vmatpush1.msra.mxu0 0.0
    %77 = vmatprep.subr.mxu0 0.0
    %78 = vmatpush1.msra.mxu0 0.0
    %79 = vmatprep.subr.mxu0 0.0
    %80 = vmatpush1.msra.mxu0 0.0
    %81 = vmatprep.subr.mxu0 0.0
    %82 = vmatpush1.msra.mxu0 0.0
    %83 = vmatprep.subr.mxu0 0.0
    %84 = vmatpush1.msra.mxu0 0.0
    %85 = vmatprep.subr.mxu0 0.0
    %86 = vmatpush1.msra.mxu0 0.0
    %87 = vmatprep.subr.mxu0 0.0
    %88 = vmatpush1.msra.mxu0 0.0
    %89 = vmatprep.subr.mxu0 0.0
    %90 = vmatpush1.msra.mxu0 0.0
    %91 = vmatprep.subr.mxu0 0.0
    %92 = vmatpush1.msra.mxu0 0.0
    %93 = vmatprep.subr.mxu0 0.0
    %94 = vmatpush1.msra.mxu0 0.0
    %95 = vmatprep.subr.mxu0 0.0
    %96 = vmatpush1.msra.mxu0 0.0
    %97 = vmatprep.subr.mxu0 0.0
    %98 = vmatpush1.msra.mxu0 0.0
    %99 = vmatprep.subr.mxu0 0.0
    %100 = vmatpush1.msra.mxu0 0.0
    %101 = vmatprep.subr.mxu0 0.0
    %102 = vmatpush1.msra.mxu0 0.0
    %103 = vmatprep.subr.mxu0 0.0
    %104 = vmatpush1.msra.mxu0 0.0
    %105 = vmatprep.subr.mxu0 0.0
    %106 = vmatpush1.msra.mxu0 0.0
    %107 = vmatprep.subr.mxu0 0.0
    %108 = vmatpush1.msra.mxu0 0.0
    %109 = vmatprep.subr.mxu0 0.0
    %110 = vmatpush1.msra.mxu0 0.0
    %111 = vmatprep.subr.mxu0 0.0
    %112 = vmatpush1.msra.mxu0 0.0
    %113 = vmatprep.subr.mxu0 0.0
    %114 = vmatpush1.msra.mxu0 0.0
    %115 = vmatprep.subr.mxu0 0.0
    %116 = vmatpush1.msra.mxu0 0.0
    %117 = vmatprep.mubr.f32.mxu0 0.0
    %118 = vmatmul.mubr.f32.gmra.mrb[0].mxu0 %v51
    %v119 = vpop.f32.mrb[0].mxu0
    %v120 = vadd.f32 %v47, %v119
    %v121 = vpop.f32.mrb[0].mxu0
    %122 = vdwg.mxu0
    %v123 = vmax.f32 %v120, 0.0
    %v124 = vld [vmem:[%s3] sm:$0xff]
    %v125 = vld [vmem:[%s3 + $0x8] sm:$0xff]
    %v126 = vld [vmem:[%s3 + $0x10] sm:$0xff]
    %v127 = vld [vmem:[%s3 + $0x18] sm:$0xff]
    %v128 = vld [vmem:[%s3 + $0x20] sm:$0xff]
    %v129 = vld [vmem:[%s3 + $0x28] sm:$0xff]
    %v130 = vld [vmem:[%s3 + $0x30] sm:$0xff]
    %v131 = vld [vmem:[%s3 + $0x38] sm:$0xff]
    %v132 = vld [vmem:[%s4] sm:$0x1]
    %v134 = vlaneseq
    %v135 = vshrl.u32 %v134, 7
    %v136 = vsub.s32 0, %v135
    %v137 = vrot.slane %v132, %v136
    %vm139 = vcmask 523264
    %v141 = vsel %vm139, %v123, 0
    %143 = vmatprep.subr.mxu0 0.0
    %144 = vmatpush1.msra.mxu0 %v124
    %145 = vmatprep.subr.mxu0 0.0
    %146 = vmatpush1.msra.mxu0 %v125
    %147 = vmatprep.subr.mxu0 0.0
    %148 = vmatpush1.msra.mxu0 %v126
    %149 = vmatprep.subr.mxu0 0.0
    %150 = vmatpush1.msra.mxu0 %v127
    %151 = vmatprep.subr.mxu0 0.0
    %152 = vmatpush1.msra.mxu0 %v128
    %153 = vmatprep.subr.mxu0 0.0
    %154 = vmatpush1.msra.mxu0 %v129
    %155 = vmatprep.subr.mxu0 0.0
    %156 = vmatpush1.msra.mxu0 %v130
    %157 = vmatprep.subr.mxu0 0.0
    %158 = vmatpush1.msra.mxu0 %v131
    %159 = vmatprep.subr.mxu0 0.0
    %160 = vmatpush1.msra.mxu0 0.0
    %161 = vmatprep.subr.mxu0 0.0
    %162 = vmatpush1.msra.mxu0 0.0
    %163 = vmatprep.subr.mxu0 0.0
    %164 = vmatpush1.msra.mxu0 0.0
    %165 = vmatprep.subr.mxu0 0.0
    %166 = vmatpush1.msra.mxu0 0.0
    %167 = vmatprep.subr.mxu0 0.0
    %168 = vmatpush1.msra.mxu0 0.0
    %169 = vmatprep.subr.mxu0 0.0
    %170 = vmatpush1.msra.mxu0 0.0
    %171 = vmatprep.subr.mxu0 0.0
    %172 = vmatpush1.msra.mxu0 0.0
    %173 = vmatprep.subr.mxu0 0.0
    %174 = vmatpush1.msra.mxu0 0.0
    %175 = vmatprep.subr.mxu0 0.0
    %176 = vmatpush1.msra.mxu0 0.0
    %177 = vmatprep.subr.mxu0 0.0
    %178 = vmatpush1.msra.mxu0 0.0
    %179 = vmatprep.subr.mxu0 0.0
    %180 = vmatpush1.msra.mxu0 0.0
    %181 = vmatprep.subr.mxu0 0.0
    %182 = vmatpush1.msra.mxu0 0.0
    %183 = vmatprep.subr.mxu0 0.0
    %184 = vmatpush1.msra.mxu0 0.0
    %185 = vmatprep.subr.mxu0 0.0
    %186 = vmatpush1.msra.mxu0 0.0
    %187 = vmatprep.subr.mxu0 0.0
    %188 = vmatpush1.msra.mxu0 0.0
    %189 = vmatprep.subr.mxu0 0.0
    %190 = vmatpush1.msra.mxu0 0.0
    %191 = vmatprep.subr.mxu0 0.0
    %192 = vmatpush1.msra.mxu0 0.0
    %193 = vmatprep.subr.mxu0 0.0
    %194 = vmatpush1.msra.mxu0 0.0
    %195 = vmatprep.subr.mxu0 0.0
    %196 = vmatpush1.msra.mxu0 0.0
    %197 = vmatprep.subr.mxu0 0.0
    %198 = vmatpush1.msra.mxu0 0.0
    %199 = vmatprep.subr.mxu0 0.0
    %200 = vmatpush1.msra.mxu0 0.0
    %201 = vmatprep.subr.mxu0 0.0
    %202 = vmatpush1.msra.mxu0 0.0
    %203 = vmatprep.subr.mxu0 0.0
    %204 = vmatpush1.msra.mxu0 0.0
    %205 = vmatprep.subr.mxu0 0.0
    %206 = vmatpush1.msra.mxu0 0.0
    %207 = vmatprep.mubr.f32.mxu0 0.0
    %208 = vmatmul.mubr.f32.gmra.mrb[0].mxu0 %v141
    %v209 = vpop.f32.mrb[0].mxu0
    %v210 = vadd.f32 %v137, %v209
    %v211 = vpop.f32.mrb[0].mxu0
    %212 = vdwg.mxu0
    %v213 = vmax.f32 %v210, 0.0
    %v214 = vld [vmem:[%s5] sm:$0xff]
    %v215 = vld [vmem:[%s5 + $0x8] sm:$0xff]
    %v216 = vld [vmem:[%s5 + $0x10] sm:$0xff]
    %v217 = vld [vmem:[%s5 + $0x18] sm:$0xff]
    %v218 = vld [vmem:[%s5 + $0x20] sm:$0xff]
    %v219 = vld [vmem:[%s5 + $0x28] sm:$0xff]
    %v220 = vld [vmem:[%s5 + $0x30] sm:$0xff]
    %v221 = vld [vmem:[%s5 + $0x38] sm:$0xff]
    %v222 = vld [vmem:[%s6] sm:$0x1]
    %v224 = vlaneseq
    %v225 = vshrl.u32 %v224, 7
    %v226 = vsub.s32 0, %v225
    %v227 = vrot.slane %v222, %v226
    %v230 = vsel %vm139, %v213, 0
    %232 = vmatprep.subr.mxu0 0.0
    %233 = vmatpush1.msra.mxu0 %v214
    %234 = vmatprep.subr.mxu0 0.0
    %235 = vmatpush1.msra.mxu0 %v215
    %236 = vmatprep.subr.mxu0 0.0
    %237 = vmatpush1.msra.mxu0 %v216
    %238 = vmatprep.subr.mxu0 0.0
    %239 = vmatpush1.msra.mxu0 %v217
    %240 = vmatprep.subr.mxu0 0.0
    %241 = vmatpush1.msra.mxu0 %v218
    %242 = vmatprep.subr.mxu0 0.0
    %243 = vmatpush1.msra.mxu0 %v219
    %244 = vmatprep.subr.mxu0 0.0
    %245 = vmatpush1.msra.mxu0 %v220
    %246 = vmatprep.subr.mxu0 0.0
    %247 = vmatpush1.msra.mxu0 %v221
    %248 = vmatprep.subr.mxu0 0.0
    %249 = vmatpush1.msra.mxu0 0.0
    %250 = vmatprep.subr.mxu0 0.0
    %251 = vmatpush1.msra.mxu0 0.0
    %252 = vmatprep.subr.mxu0 0.0
    %253 = vmatpush1.msra.mxu0 0.0
    %254 = vmatprep.subr.mxu0 0.0
    %255 = vmatpush1.msra.mxu0 0.0
    %256 = vmatprep.subr.mxu0 0.0
    %257 = vmatpush1.msra.mxu0 0.0
    %258 = vmatprep.subr.mxu0 0.0
    %259 = vmatpush1.msra.mxu0 0.0
    %260 = vmatprep.subr.mxu0 0.0
    %261 = vmatpush1.msra.mxu0 0.0
    %262 = vmatprep.subr.mxu0 0.0
    %263 = vmatpush1.msra.mxu0 0.0
    %264 = vmatprep.subr.mxu0 0.0
    %265 = vmatpush1.msra.mxu0 0.0
    %266 = vmatprep.subr.mxu0 0.0
    %267 = vmatpush1.msra.mxu0 0.0
    %268 = vmatprep.subr.mxu0 0.0
    %269 = vmatpush1.msra.mxu0 0.0
    %270 = vmatprep.subr.mxu0 0.0
    %271 = vmatpush1.msra.mxu0 0.0
    %272 = vmatprep.subr.mxu0 0.0
    %273 = vmatpush1.msra.mxu0 0.0
    %274 = vmatprep.subr.mxu0 0.0
    %275 = vmatpush1.msra.mxu0 0.0
    %276 = vmatprep.subr.mxu0 0.0
    %277 = vmatpush1.msra.mxu0 0.0
    %278 = vmatprep.subr.mxu0 0.0
    %279 = vmatpush1.msra.mxu0 0.0
    %280 = vmatprep.subr.mxu0 0.0
    %281 = vmatpush1.msra.mxu0 0.0
    %282 = vmatprep.subr.mxu0 0.0
    %283 = vmatpush1.msra.mxu0 0.0
    %284 = vmatprep.subr.mxu0 0.0
    %285 = vmatpush1.msra.mxu0 0.0
    %286 = vmatprep.subr.mxu0 0.0
    %287 = vmatpush1.msra.mxu0 0.0
    %288 = vmatprep.subr.mxu0 0.0
    %289 = vmatpush1.msra.mxu0 0.0
    %290 = vmatprep.subr.mxu0 0.0
    %291 = vmatpush1.msra.mxu0 0.0
    %292 = vmatprep.subr.mxu0 0.0
    %293 = vmatpush1.msra.mxu0 0.0
    %294 = vmatprep.subr.mxu0 0.0
    %295 = vmatpush1.msra.mxu0 0.0
    %296 = vmatprep.mubr.f32.mxu0 0.0
    %297 = vmatmul.mubr.f32.gmra.mrb[0].mxu0 %v230
    %v298 = vpop.f32.mrb[0].mxu0
    %v299 = vadd.f32 %v227, %v298
    %v300 = vpop.f32.mrb[0].mxu0
    %301 = vdwg.mxu0
    %v302 = vtanh.pop %v299
    %v303 = vmul.f32 %v302, 2.0
    %vm304 = vcmask 64512
    %305 = vst.msk [vmem:[#allocation5] sm:$0xff] %vm304, %v303
    // Predicated region
    $region34: #{tpu_custom_call.1} parent=1 // pred_check
      _
    $region35: #{tpu_custom_call.1} parent=1 // pred_check_branch
      %307 = sbr.rel (0) target = $region37
    $region36: #{tpu_custom_call.1} parent=1 // pred_region
      %s309 = ssub.s32 128, 128
      %310 = vsyncadd [#allocation4], %s309
      %s312 = sshll.u32 [#allocation5], 4
      %s313 = int_to_ptr.vmem [resolvable:$true] %s312
      %315 = dma.vmem_to_hbm [thread:$0]  %s313, 128, %s7, [#allocation4]
    $region37: #{tpu_custom_call.1} parent=1 // pred_fallthru
      _
    // Predicated region
    $region38: #{tpu_custom_call.1} parent=1 // pred_check
      _
    $region39: #{tpu_custom_call.1} parent=1 // pred_check_branch
      %317 = sbr.rel (0) target = $region41
    $region40: #{tpu_custom_call.1} parent=1 // pred_region
      %318 = dma.done [#allocation4], 128
    $region41: #{tpu_custom_call.1} parent=1 // pred_fallthru
      _
    %319 = vsyncpa [#allocation3], 1
    %320 = vsyncpa [#allocation4], 1

</llo_original>
